<compile_context>
chip_gen: v6e
topology: v6e:2x2x1
jax: 0.10.0
libtpu: 0.0.40
codegen_flags: <defaults>
</compile_context>

<pallas_src>
import functools

import jax
import jax.numpy as jnp
from jax import lax
from jax.experimental import pallas as pl
from jax.experimental.pallas import tpu as pltpu

EPS = 1e-5


def _dsbn_kernel(x_ref, onehot_ref, w_ref, b_ref, out_ref, *, hw):
    x = x_ref[...].astype(jnp.float32)          # (N, TC, HW)
    oh = onehot_ref[...]                         # (D, N)  one-hot domain membership (f32)
    w = w_ref[...]                               # (TC, D) gamma (channel-major, tiny)
    b = b_ref[...]                               # (TC, D) beta

    # Contraction helper used for every tiny matmul below (runs on the MXU).
    cdot = functools.partial(
        lax.dot_general,
        dimension_numbers=(((0,), (1,)), ((), ())),  # contract lhs dim 0 with rhs dim 1
        preferred_element_type=jnp.float32)

    # ---- Phase 1a: spatial sums -> per-(channel, domain) means.
    s = jnp.sum(x, axis=2)                       # (N, TC)  sum_hw x
    cnt = jnp.sum(oh, axis=1, keepdims=True)     # (D, 1)   samples per domain
    ohn = oh * (1.0 / jnp.maximum(cnt * hw, 1.0))  # (D, N)  safe for empty domains
    mean_cd = cdot(s, ohn)                       # (TC, D)  E[x] per (channel, domain)

    # ---- Phase 1b: centered second moment (x is resident in VMEM, so this second
    #      pass costs no extra HBM traffic and avoids E[x^2]-mean^2 cancellation).
    mean_nc = cdot(oh, mean_cd)                  # (N, TC)  each sample's own-domain mean
    d = x - mean_nc[:, :, None]                  # (N, TC, HW)
    ssq = jnp.sum(d * d, axis=2)                 # (N, TC)
    var_cd = cdot(ssq, ohn)                      # (TC, D)  biased variance per (chan, dom)

    # ---- Fold eps / rsqrt / affine into per-(sample, channel) scale & shift.
    g = lax.rsqrt(var_cd + EPS) * w              # (TC, D)
    shift_cd = b - mean_cd * g                   # (TC, D)
    scale_nc = cdot(oh, g)                       # (N, TC)
    shift_nc = cdot(oh, shift_cd)                # (N, TC)
    # Samples matching no domain have an all-zero one-hot column -> scale=shift=0
    # -> out=0, matching the PyTorch module's zero-initialized output.

    # ---- Phase 2: single write-once normalize pass.
    out_ref[...] = (x * scale_nc[:, :, None]
                    + shift_nc[:, :, None]).astype(out_ref.dtype)


def _vmem_capacity_bytes():
    """Physical VMEM per TensorCore for the current chip (conservative fallback)."""
    try:
        info = pltpu.get_tpu_info()
        cap = getattr(info, "vmem_capacity_bytes", None)
        if cap:
            return int(cap)
    except Exception:
        pass
    return 64 << 20  # v7x per-core size: the most restrictive generation


def _choose_tile_c(C, N, HW, itemsize, budget_bytes):
    """Channel tile for an (N, tile_c, HW) block.

    tile_c must be a multiple of 8 (sublane rule on the block's second-to-last dim)
    or equal to the full channel count; non-divisor tiles are fine
    (grid = cdiv(C, tile_c); boundary blocks are padded on read / clipped on write,
    and channels never mix, so padded channels cannot corrupt real ones).
    """
    bytes_per_channel = N * HW * itemsize
    if C <= 8:
        # Only the full-extent block is legal below 8 channels.
        return C, 1
    fit = max(int(budget_bytes // bytes_per_channel), 1)
    tile = max((min(fit, C) // 8) * 8, 8)
    # v7x has 2 TensorCores per chip: ensure the "parallel" channel axis has >= 2
    # steps so both cores get work (channels are independent, so this is free).
    two_step = 8 * pl.cdiv(pl.cdiv(C, 2), 8)
    tile = min(tile, max(two_step, 8))
    return tile, pl.cdiv(C, tile)


def domain_specific_batchnorm(x, domain_id, weight, bias, num_domains):
    """x: (N, C, H, W); domain_id: (N,) int32; weight/bias: (D, C). Returns (N, C, H, W)."""
    N, C, H, W = x.shape
    HW = H * W
    D = num_domains

    # Native layout: this reshape is free (no HBM pass).
    x3 = x.reshape(N, C, HW)
    onehot = (domain_id[None, :] ==
              jnp.arange(D, dtype=domain_id.dtype)[:, None]).astype(jnp.float32)  # (D, N)
    w_t = weight.astype(jnp.float32).T   # (C, D)  tiny transpose (KBs, not an x-sized pass)
    b_t = bias.astype(jnp.float32).T     # (C, D)

    # Generation-aware VMEM sizing.
    cap = _vmem_capacity_bytes()
    vmem_limit = min(int(0.85 * cap), 112 << 20)
    block_budget = min(16 << 20, (vmem_limit - (2 << 20)) // 7)

    tile_c, grid_c = _choose_tile_c(C, N, HW, 4, block_budget)   # budget in f32 bytes
    block_bytes = N * tile_c * HW * 4
    # 2x in + 2x out DMA windows (double-buffered) + ~3 block-sized f32 temporaries.
    vmem_need = 7 * block_bytes + (2 << 20)
    vmem_request = int(min(max(vmem_need, 32 << 20), int(0.95 * cap)))

    cost = pl.CostEstimate(
        flops=int(8 * N * C * HW),
        transcendentals=int(C * D),
        bytes_accessed=int(2 * N * C * HW * x.dtype.itemsize),
    )

    out3 = pl.pallas_call(
        functools.partial(_dsbn_kernel, hw=float(HW)),
        out_shape=jax.ShapeDtypeStruct((N, C, HW), x.dtype),
        grid=(grid_c,),
        in_specs=[
            pl.BlockSpec((N, tile_c, HW), lambda c: (0, c, 0)),   # x channel tile
            pl.BlockSpec((D, N), lambda c: (0, 0)),               # one-hot (shared, tiny)
            pl.BlockSpec((tile_c, D), lambda c: (c, 0)),          # gamma tile
            pl.BlockSpec((tile_c, D), lambda c: (c, 0)),          # beta tile
        ],
        out_specs=pl.BlockSpec((N, tile_c, HW), lambda c: (0, c, 0)),
        compiler_params=pltpu.CompilerParams(
            dimension_semantics=("parallel",),
            vmem_limit_bytes=vmem_request,
        ),
        cost_estimate=cost,
    )(x3, onehot, w_t, b_t)

    return out3.reshape(N, C, H, W)


def _reference(x, domain_id, weight, bias, num_domains):
    """Pure-JAX reference matching PyTorch DomainSpecificBatchNorm.forward (train mode)."""
    N, C, H, W = x.shape
    out = jnp.zeros_like(x)
    for i in range(num_domains):
        m = (domain_id == i).astype(x.dtype)[:, None, None, None]
        cnt = jnp.sum(m)
        denom = jnp.maximum(cnt * H * W, 1.0)
        xm = x * m
        mean = jnp.sum(xm, axis=(0, 2, 3), keepdims=True) / denom
        var = jnp.sum(m * (x - mean) ** 2, axis=(0, 2, 3), keepdims=True) / denom
        normed = (x - mean) * lax.rsqrt(var + EPS) \
            * weight[i][None, :, None, None] + bias[i][None, :, None, None]
        out = out + normed * m
    return out


if __name__ == "__main__":
    key = jax.random.PRNGKey(0)
    kx, kd, kw, kb = jax.random.split(key, 4)

    N, C, H, W = 8, 4, 16, 16
    NUM_DOMAINS = 3

    # Non-zero mean exercises the centered-variance path; non-trivial affine params
    # exercise the folded scale/shift path.
    x = jax.random.normal(kx, (N, C, H, W), dtype=jnp.float32) + 3.0
    domain_id = jax.random.randint(kd, (N,), 0, NUM_DOMAINS, dtype=jnp.int32)
    weight = 1.0 + 0.1 * jax.random.normal(kw, (NUM_DOMAINS, C), dtype=jnp.float32)
    bias = 0.1 * jax.random.normal(kb, (NUM_DOMAINS, C), dtype=jnp.float32)

    out = domain_specific_batchnorm(x, domain_id, weight, bias, NUM_DOMAINS)
    out = jax.block_until_ready(out)

    ref = _reference(x, domain_id, weight, bias, NUM_DOMAINS)
    assert out.shape == x.shape and out.dtype == x.dtype
    assert jnp.allclose(out, ref, atol=1e-4, rtol=1e-4), "mismatch vs reference"

    print("KERNEL_OK")
</pallas_src>

<mosaic_0001>
module attributes {stable_mosaic.version = 11 : i64} {
  func.func @_dsbn_kernel(%arg0: i32, %arg1: memref<8x4x256xf32, #tpu.memory_space<vmem>>, %arg2: memref<3x8xf32, #tpu.memory_space<vmem>>, %arg3: memref<4x3xf32, #tpu.memory_space<vmem>>, %arg4: memref<4x3xf32, #tpu.memory_space<vmem>>, %arg5: memref<8x4x256xf32, #tpu.memory_space<vmem>>) attributes {dimension_semantics = [#tpu.dimension_semantics<parallel>], iteration_bounds = array<i64: 1>, scalar_prefetch = 0 : i64, scratch_operands = 0 : i64, tpu.core_type = #tpu.core_type<tc>, window_params = [{transform_indices = @transform_0, window_bounds = array<i64: 8, 4, 256>}, {pipeline_mode = #tpu.pipeline_mode<synchronous>, transform_indices = @transform_1, window_bounds = array<i64: 3, 8>}, {transform_indices = @transform_2, window_bounds = array<i64: 4, 3>}, {transform_indices = @transform_3, window_bounds = array<i64: 4, 3>}, {transform_indices = @transform_4, window_bounds = array<i64: 8, 4, 256>}]} {
    %c0 = arith.constant 0 : index
    %c0_0 = arith.constant 0 : index
    %c0_1 = arith.constant 0 : index
    %0 = vector.load %arg1[%c0, %c0_0, %c0_1] : memref<8x4x256xf32, #tpu.memory_space<vmem>>, vector<8x4x256xf32>
    %c0_2 = arith.constant 0 : index
    %c0_3 = arith.constant 0 : index
    %1 = vector.load %arg2[%c0_2, %c0_3] : memref<3x8xf32, #tpu.memory_space<vmem>>, vector<3x8xf32>
    %c0_4 = arith.constant 0 : index
    %c0_5 = arith.constant 0 : index
    %2 = vector.load %arg3[%c0_4, %c0_5] : memref<4x3xf32, #tpu.memory_space<vmem>>, vector<4x3xf32>
    %c0_6 = arith.constant 0 : index
    %c0_7 = arith.constant 0 : index
    %3 = vector.load %arg4[%c0_6, %c0_7] : memref<4x3xf32, #tpu.memory_space<vmem>>, vector<4x3xf32>
    %cst = arith.constant dense<0.000000e+00> : vector<8x4xf32>
    %4 = vector.multi_reduction <add>, %0, %cst [2] : vector<8x4x256xf32> to vector<8x4xf32>
    %cst_8 = arith.constant dense<0.000000e+00> : vector<3xf32>
    %5 = vector.multi_reduction <add>, %1, %cst_8 [1] : vector<3x8xf32> to vector<3xf32>
    %6 = vector.shape_cast %5 : vector<3xf32> to vector<3x1xf32>
    %cst_9 = arith.constant 2.560000e+02 : f32
    %7 = vector.broadcast %cst_9 : f32 to vector<3x1xf32>
    %8 = arith.mulf %6, %7 : vector<3x1xf32>
    %cst_10 = arith.constant 1.000000e+00 : f32
    %9 = vector.broadcast %cst_10 : f32 to vector<3x1xf32>
    %10 = arith.maximumf %8, %9 : vector<3x1xf32>
    %cst_11 = arith.constant 1.000000e+00 : f32
    %11 = vector.broadcast %cst_11 : f32 to vector<3x1xf32>
    %12 = arith.divf %11, %10 : vector<3x1xf32>
    %13 = vector.broadcast %12 : vector<3x1xf32> to vector<3x8xf32>
    %14 = arith.mulf %1, %13 : vector<3x8xf32>
    %cst_12 = arith.constant dense<0.000000e+00> : vector<4x3xf32>
    %15 = tpu.matmul %4, %14, %cst_12 {dimension_numbers = #tpu.dot_dimension_numbers<[0], [1], [1], [0], [0, 1, 1, 0], [], []>} : vector<8x4xf32>, vector<3x8xf32>, vector<4x3xf32> -> vector<4x3xf32>
    %cst_13 = arith.constant dense<0.000000e+00> : vector<8x4xf32>
    %16 = tpu.matmul %1, %15, %cst_13 {dimension_numbers = #tpu.dot_dimension_numbers<[0], [1], [1], [0], [0, 1, 1, 0], [], []>} : vector<3x8xf32>, vector<4x3xf32>, vector<8x4xf32> -> vector<8x4xf32>
    %17 = vector.shape_cast %16 : vector<8x4xf32> to vector<8x4x1xf32>
    %18 = vector.broadcast %17 : vector<8x4x1xf32> to vector<8x4x256xf32>
    %19 = arith.subf %0, %18 : vector<8x4x256xf32>
    %20 = arith.mulf %19, %19 : vector<8x4x256xf32>
    %cst_14 = arith.constant dense<0.000000e+00> : vector<8x4xf32>
    %21 = vector.multi_reduction <add>, %20, %cst_14 [2] : vector<8x4x256xf32> to vector<8x4xf32>
    %cst_15 = arith.constant dense<0.000000e+00> : vector<4x3xf32>
    %22 = tpu.matmul %21, %14, %cst_15 {dimension_numbers = #tpu.dot_dimension_numbers<[0], [1], [1], [0], [0, 1, 1, 0], [], []>} : vector<8x4xf32>, vector<3x8xf32>, vector<4x3xf32> -> vector<4x3xf32>
    %cst_16 = arith.constant 9.99999974E-6 : f32
    %23 = vector.broadcast %cst_16 : f32 to vector<4x3xf32>
    %24 = arith.addf %22, %23 : vector<4x3xf32>
    %25 = math.rsqrt %24 : vector<4x3xf32>
    %26 = arith.mulf %25, %2 : vector<4x3xf32>
    %27 = arith.mulf %15, %26 : vector<4x3xf32>
    %28 = arith.subf %3, %27 : vector<4x3xf32>
    %cst_17 = arith.constant dense<0.000000e+00> : vector<8x4xf32>
    %29 = tpu.matmul %1, %26, %cst_17 {dimension_numbers = #tpu.dot_dimension_numbers<[0], [1], [1], [0], [0, 1, 1, 0], [], []>} : vector<3x8xf32>, vector<4x3xf32>, vector<8x4xf32> -> vector<8x4xf32>
    %cst_18 = arith.constant dense<0.000000e+00> : vector<8x4xf32>
    %30 = tpu.matmul %1, %28, %cst_18 {dimension_numbers = #tpu.dot_dimension_numbers<[0], [1], [1], [0], [0, 1, 1, 0], [], []>} : vector<3x8xf32>, vector<4x3xf32>, vector<8x4xf32> -> vector<8x4xf32>
    %31 = vector.shape_cast %29 : vector<8x4xf32> to vector<8x4x1xf32>
    %32 = vector.broadcast %31 : vector<8x4x1xf32> to vector<8x4x256xf32>
    %33 = arith.mulf %0, %32 : vector<8x4x256xf32>
    %34 = vector.shape_cast %30 : vector<8x4xf32> to vector<8x4x1xf32>
    %35 = vector.broadcast %34 : vector<8x4x1xf32> to vector<8x4x256xf32>
    %36 = arith.addf %33, %35 : vector<8x4x256xf32>
    %c0_19 = arith.constant 0 : index
    %c0_20 = arith.constant 0 : index
    %c0_21 = arith.constant 0 : index
    %37 = vector.load %arg5[%c0_19, %c0_20, %c0_21] : memref<8x4x256xf32, #tpu.memory_space<vmem>>, vector<8x4x256xf32>
    tpu.vector_store %arg5[%c0_19, %c0_20, %c0_21], %36 {strides = array<i32>} : memref<8x4x256xf32, #tpu.memory_space<vmem>>, vector<8x4x256xf32>,
    return
  }
  func.func @transform_0(%arg0: i32) -> (i32, i32, i32) {
    %c0_i32 = arith.constant 0 : i32
    %c0_i32_0 = arith.constant 0 : i32
    %c0_i32_1 = arith.constant 0 : i32
    return %c0_i32, %arg0, %c0_i32_0 : i32, i32, i32
  }
  func.func @transform_1(%arg0: i32) -> (i32, i32) {
    %c0_i32 = arith.constant 0 : i32
    %c0_i32_0 = arith.constant 0 : i32
    %c0_i32_1 = arith.constant 0 : i32
    return %c0_i32, %c0_i32_0 : i32, i32
  }
  func.func @transform_2(%arg0: i32) -> (i32, i32) {
    %c0_i32 = arith.constant 0 : i32
    %c0_i32_0 = arith.constant 0 : i32
    return %arg0, %c0_i32 : i32, i32
  }
  func.func @transform_3(%arg0: i32) -> (i32, i32) {
    %c0_i32 = arith.constant 0 : i32
    %c0_i32_0 = arith.constant 0 : i32
    return %arg0, %c0_i32 : i32, i32
  }
  func.func @transform_4(%arg0: i32) -> (i32, i32, i32) {
    %c0_i32 = arith.constant 0 : i32
    %c0_i32_0 = arith.constant 0 : i32
    %c0_i32_1 = arith.constant 0 : i32
    return %c0_i32, %arg0, %c0_i32_0 : i32, i32, i32
  }
}

</mosaic_0001>

<llo_original>
// kernel: tpu_custom_call.1
$region0: #{tpu_custom_call.1}
  #allocation0 [shape = 'u32[]', space=smem, size = 0x4, offset = 0x4, fixed_abs, tag = 'smem constant byte address 0x4 - core index']
  #allocation1 [shape = 'u32[144,128]{1,0:T(1,128)}', space=vmem, size = 0x12000, scoped, tag = 'internal scratch']
  %s0 = inlined_call_operand.hbm [shape: f32[8,4,256], index: 0, kind: input, shape index: {}]
  %s1 = inlined_call_operand.hbm [shape: f32[3,8], index: 1, kind: input, shape index: {}]
  %s2 = inlined_call_operand.hbm [shape: f32[4,3], index: 2, kind: input, shape index: {}]
  %s3 = inlined_call_operand.vmem [shape: f32[4,3], index: 3, kind: input, shape index: {}]
  %s4 = inlined_call_operand.hbm [shape: f32[8,4,256], index: 4, kind: output, shape index: {}]
  %s5 = sld [smem:[#allocation0]]
  $region38: #{tpu_custom_call.1} parent=0
    _
  %s7 = ssub.s32 1, %s5
  %s8 = scalar_select 0, %s7, %s5
  $region1: #{tpu_custom_call.1} parent=0
    #allocation2 [shape = 'u8[32768]{0}', space=vmem, size = 0x8000, scoped, tag = 'input window, operand 0, single buffered']
    #allocation3 [shape = 's32[1]{0}', space=sflag, size = 0x4, scoped, tag = 'scoped memory for tpu_custom_call.1']
    #allocation4 [shape = 's32[1]{0}', space=sflag, size = 0x4, scoped, tag = 'scoped memory for tpu_custom_call.1']
    #allocation5 [shape = 'u8[2048]{0}', space=vmem, size = 0x800, scoped, tag = 'input window, operand 1, single buffered']
    #allocation6 [shape = 's32[1]{0}', space=sflag, size = 0x4, scoped, tag = 'scoped memory for tpu_custom_call.1']
    #allocation7 [shape = 'u8[2048]{0}', space=vmem, size = 0x800, scoped, tag = 'input window, operand 2, single buffered']
    #allocation8 [shape = 'u8[32768]{0}', space=vmem, size = 0x8000, scoped, tag = 'output window, operand 0, single buffered']
    %9 = vsyncpa [#allocation3], 0
    %10 = vsyncpa [#allocation6], 0
    %11 = vsyncpa [#allocation4], 0
    // Predicated region
    $region2: #{tpu_custom_call.1} parent=1 // pred_check
      _
    $region3: #{tpu_custom_call.1} parent=1 // pred_check_branch
      %13 = sbr.rel (0) target = $region5
    $region4: #{tpu_custom_call.1} parent=1 // pred_region
      %s15 = ssub.s32 1024, 1024
      %16 = vsyncadd [#allocation3], %s15
      %s17 = sshll.u32 [#allocation2], 4
      %s18 = int_to_ptr.vmem [resolvable:$true] %s17
      %23 = dma.hbm_to_vmem [thread:$0]  %s0, 1024, %s18, [#allocation3], 128, 128, 8
    $region5: #{tpu_custom_call.1} parent=1 // pred_fallthru
      _
    // Predicated region
    $region6: #{tpu_custom_call.1} parent=1 // pred_check
      _
    $region7: #{tpu_custom_call.1} parent=1 // pred_check_branch
      %25 = sbr.rel (0) target = $region9
    $region8: #{tpu_custom_call.1} parent=1 // pred_region
      %s27 = ssub.s32 64, 64
      %28 = vsyncadd [#allocation6], %s27
      %s30 = sshll.u32 [#allocation5], 4
      %s31 = int_to_ptr.vmem [resolvable:$true] %s30
      %33 = dma.hbm_to_vmem [thread:$0]  %s1, 64, %s31, [#allocation6]
    $region9: #{tpu_custom_call.1} parent=1 // pred_fallthru
      _
    // Predicated region
    $region10: #{tpu_custom_call.1} parent=1 // pred_check
      _
    $region11: #{tpu_custom_call.1} parent=1 // pred_check_branch
      %35 = sbr.rel (0) target = $region13
    $region12: #{tpu_custom_call.1} parent=1 // pred_region
      %s37 = ssub.s32 64, 64
      %38 = vsyncadd [#allocation6], %s37
      %s40 = sshll.u32 [#allocation7], 4
      %s41 = int_to_ptr.vmem [resolvable:$true] %s40
      %43 = dma.hbm_to_vmem [thread:$0]  %s2, 64, %s41, [#allocation6]
    $region13: #{tpu_custom_call.1} parent=1 // pred_fallthru
      _
    // Predicated region
    $region14: #{tpu_custom_call.1} parent=1 // pred_check
      _
    $region15: #{tpu_custom_call.1} parent=1 // pred_check_branch
      %45 = sbr.rel (0) target = $region17
    $region16: #{tpu_custom_call.1} parent=1 // pred_region
      _
    $region17: #{tpu_custom_call.1} parent=1 // pred_fallthru
      _
    // Predicated region
    $region18: #{tpu_custom_call.1} parent=1 // pred_check
      _
    $region19: #{tpu_custom_call.1} parent=1 // pred_check_branch
      %47 = sbr.rel (0) target = $region21
    $region20: #{tpu_custom_call.1} parent=1 // pred_region
      %48 = dma.done [#allocation3], 1024
    $region21: #{tpu_custom_call.1} parent=1 // pred_fallthru
      _
    // Predicated region
    $region22: #{tpu_custom_call.1} parent=1 // pred_check
      _
    $region23: #{tpu_custom_call.1} parent=1 // pred_check_branch
      %50 = sbr.rel (0) target = $region25
    $region24: #{tpu_custom_call.1} parent=1 // pred_region
      %51 = dma.done [#allocation6], 64
    $region25: #{tpu_custom_call.1} parent=1 // pred_fallthru
      _
    // Predicated region
    $region26: #{tpu_custom_call.1} parent=1 // pred_check
      _
    $region27: #{tpu_custom_call.1} parent=1 // pred_check_branch
      %53 = sbr.rel (0) target = $region29
    $region28: #{tpu_custom_call.1} parent=1 // pred_region
      %54 = dma.done [#allocation6], 64
    $region29: #{tpu_custom_call.1} parent=1 // pred_fallthru
      _
    %v55 = vld [vmem:[#allocation2] sm:$0xff]
    %v56 = vld [vmem:[#allocation2 + $0x8] sm:$0xff]
    %v57 = vld [vmem:[#allocation2 + $0x10] sm:$0xff]
    %v58 = vld [vmem:[#allocation2 + $0x18] sm:$0xff]
    %v59 = vld [vmem:[#allocation2 + $0x20] sm:$0xff]
    %v60 = vld [vmem:[#allocation2 + $0x28] sm:$0xff]
    %v61 = vld [vmem:[#allocation2 + $0x30] sm:$0xff]
    %v62 = vld [vmem:[#allocation2 + $0x38] sm:$0xff]
    %v63 = vld [vmem:[#allocation5] sm:$0x7]
    %v64 = vld [vmem:[#allocation7] sm:$0xf]
    %v65 = vld [vmem:[%s3] sm:$0xf]
    %v74 = vcombine.high %v55, %v55
    %v75 = vcombine.high %v56, %v56
    %v76 = vcombine.high %v57, %v57
    %v77 = vcombine.high %v58, %v58
    %v78 = vcombine.high %v59, %v59
    %v79 = vcombine.high %v60, %v60
    %v80 = vcombine.high %v61, %v61
    %v81 = vcombine.high %v62, %v62
    %vm90 = vcmask 1043456
    %v91 = vsel %vm90, %v55, 0.0
    %v92 = vsel %vm90, %v74, 0.0
    %v93 = vadd.f32 %v91, %v92
    %94 = vadd.xlane.f32.xlu0 %v93
    %v95 = vpop.xlane.xlu0 %94
    %v96 = vsel %vm90, %v56, 0.0
    %v97 = vsel %vm90, %v75, 0.0
    %v98 = vadd.f32 %v96, %v97
    %99 = vadd.xlane.f32.xlu0 %v98
    %v100 = vpop.xlane.xlu0 %99
    %v101 = vsel %vm90, %v57, 0.0
    %v102 = vsel %vm90, %v76, 0.0
    %v103 = vadd.f32 %v101, %v102
    %104 = vadd.xlane.f32.xlu0 %v103
    %v105 = vpop.xlane.xlu0 %104
    %v106 = vsel %vm90, %v58, 0.0
    %v107 = vsel %vm90, %v77, 0.0
    %v108 = vadd.f32 %v106, %v107
    %109 = vadd.xlane.f32.xlu0 %v108
    %v110 = vpop.xlane.xlu0 %109
    %v111 = vsel %vm90, %v59, 0.0
    %v112 = vsel %vm90, %v78, 0.0
    %v113 = vadd.f32 %v111, %v112
    %114 = vadd.xlane.f32.xlu0 %v113
    %v115 = vpop.xlane.xlu0 %114
    %v116 = vsel %vm90, %v60, 0.0
    %v117 = vsel %vm90, %v79, 0.0
    %v118 = vadd.f32 %v116, %v117
    %119 = vadd.xlane.f32.xlu0 %v118
    %v120 = vpop.xlane.xlu0 %119
    %v121 = vsel %vm90, %v61, 0.0
    %v122 = vsel %vm90, %v80, 0.0
    %v123 = vadd.f32 %v121, %v122
    %124 = vadd.xlane.f32.xlu0 %v123
    %v125 = vpop.xlane.xlu0 %124
    %v126 = vsel %vm90, %v62, 0.0
    %v127 = vsel %vm90, %v81, 0.0
    %v128 = vadd.f32 %v126, %v127
    %129 = vadd.xlane.f32.xlu0 %v128
    %v130 = vpop.xlane.xlu0 %129
    %vm131 = vcmask 59392
    %v132 = vsel %vm131, %v63, 0.0
    %133 = vadd.xlane.f32.xlu0 %v132
    %v134 = vpop.xlane.xlu0 %133
    %v135 = vmul.f32 %v134, 256.0
    %v136 = vmax.f32 %v135, 1.0
    %v137 = vrcp.pop %v136
    %v138 = vmul.f32 1.0, %v137
    %v139 = vmul.f32 %v63, %v138
    %v148 = vlaneseq
    %v149 = vand.u32 %v148, 127
    %v150 = vlaneseq
    %v151 = vshrl.u32 %v150, 7
    %v152 = vsub.s32 %v149, %v151
    %v153 = vrot.slane %v95, %v152
    %v154 = vlaneseq
    %v155 = vshrl.u32 %v154, 7
    %v156 = vsub.s32 %v149, %v155
    %v157 = vrot.slane %v100, %v156
    %v158 = vlaneseq
    %v159 = vshrl.u32 %v158, 7
    %v160 = vsub.s32 %v149, %v159
    %v161 = vrot.slane %v105, %v160
    %v162 = vlaneseq
    %v163 = vshrl.u32 %v162, 7
    %v164 = vsub.s32 %v149, %v163
    %v165 = vrot.slane %v110, %v164
    %v166 = vlaneseq
    %v167 = vshrl.u32 %v166, 7
    %v168 = vsub.s32 %v149, %v167
    %v169 = vrot.slane %v115, %v168
    %v170 = vlaneseq
    %v171 = vshrl.u32 %v170, 7
    %v172 = vsub.s32 %v149, %v171
    %v173 = vrot.slane %v120, %v172
    %v174 = vlaneseq
    %v175 = vshrl.u32 %v174, 7
    %v176 = vsub.s32 %v149, %v175
    %v177 = vrot.slane %v125, %v176
    %v178 = vlaneseq
    %v179 = vshrl.u32 %v178, 7
    %v180 = vsub.s32 %v149, %v179
    %v181 = vrot.slane %v130, %v180
    %vm182 = vcmask 1041409
    %v183 = vsel %vm182, %v157, %v153
    %vm184 = vcmask 1042434
    %v185 = vsel %vm184, %v161, %v183
    %vm186 = vcmask 1043459
    %v187 = vsel %vm186, %v165, %v185
    %vm188 = vcmask 1044484
    %v189 = vsel %vm188, %v169, %v187
    %vm190 = vcmask 1045509
    %v191 = vsel %vm190, %v173, %v189
    %vm192 = vcmask 1046534
    %v193 = vsel %vm192, %v177, %v191
    %vm194 = vcmask 1047559
    %v195 = vsel %vm194, %v181, %v193
    %197 = vxpose.xlu0.b32.start [1/16] %v195, 128
    %198 = vxpose.xlu0.b32.cont [2/16] 0.0, 128
    %199 = vxpose.xlu0.b32.cont [3/16] 0.0, 128
    %200 = vxpose.xlu0.b32.cont [4/16] 0.0, 128
    %201 = vxpose.xlu0.b32.cont [5/16] 0.0, 128
    %202 = vxpose.xlu0.b32.cont [6/16] 0.0, 128
    %203 = vxpose.xlu0.b32.cont [7/16] 0.0, 128
    %204 = vxpose.xlu0.b32.cont [8/16] 0.0, 128
    %205 = vxpose.xlu0.b32.cont [9/16] 0.0, 128
    %206 = vxpose.xlu0.b32.cont [10/16] 0.0, 128
    %207 = vxpose.xlu0.b32.cont [11/16] 0.0, 128
    %208 = vxpose.xlu0.b32.cont [12/16] 0.0, 128
    %209 = vxpose.xlu0.b32.cont [13/16] 0.0, 128
    %210 = vxpose.xlu0.b32.cont [14/16] 0.0, 128
    %211 = vxpose.xlu0.b32.cont [15/16] 0.0, 128
    %212 = vxpose.xlu0.b32.end [16/16] 0.0, 128
    %v213 = vpop.trf.xlu0
    %v214 = vpop.trf.xlu0
    %v215 = vpop.trf.xlu0
    %v216 = vpop.trf.xlu0
    %v217 = vpop.trf.xlu0
    %v218 = vpop.trf.xlu0
    %v219 = vpop.trf.xlu0
    %v220 = vpop.trf.xlu0
    %v221 = vpop.trf.xlu0
    %v222 = vpop.trf.xlu0
    %v223 = vpop.trf.xlu0
    %v224 = vpop.trf.xlu0
    %v225 = vpop.trf.xlu0
    %v226 = vpop.trf.xlu0
    %v227 = vpop.trf.xlu0
    %v228 = vpop.trf.xlu0
    %vm229 = vcmask 64512
    %v231 = vsel %vm229, %v213, 0
    %v234 = vsel %vm229, %v139, 0
    %236 = vmatprep.subr.mxu0 0.0
    %237 = vmatpush1.xpose.msra.mxu0 0.0
    %238 = vmatprep.subr.mxu0 0.0
    %239 = vmatpush1.xpose.msra.mxu0 0.0
    %240 = vmatprep.subr.mxu0 0.0
    %241 = vmatpush1.xpose.msra.mxu0 0.0
    %242 = vmatprep.subr.mxu0 0.0
    %243 = vmatpush1.xpose.msra.mxu0 0.0
    %244 = vmatprep.subr.mxu0 0.0
    %245 = vmatpush1.xpose.msra.mxu0 0.0
    %246 = vmatprep.subr.mxu0 0.0
    %247 = vmatpush1.xpose.msra.mxu0 0.0
    %248 = vmatprep.subr.mxu0 0.0
    %249 = vmatpush1.xpose.msra.mxu0 0.0
    %250 = vmatprep.subr.mxu0 0.0
    %251 = vmatpush1.xpose.msra.mxu0 0.0
    %252 = vmatprep.subr.mxu0 0.0
    %253 = vmatpush1.xpose.msra.mxu0 0.0
    %254 = vmatprep.subr.mxu0 0.0
    %255 = vmatpush1.xpose.msra.mxu0 0.0
    %256 = vmatprep.subr.mxu0 0.0
    %257 = vmatpush1.xpose.msra.mxu0 0.0
    %258 = vmatprep.subr.mxu0 0.0
    %259 = vmatpush1.xpose.msra.mxu0 0.0
    %260 = vmatprep.subr.mxu0 0.0
    %261 = vmatpush1.xpose.msra.mxu0 0.0
    %262 = vmatprep.subr.mxu0 0.0
    %263 = vmatpush1.xpose.msra.mxu0 0.0
    %264 = vmatprep.subr.mxu0 0.0
    %265 = vmatpush1.xpose.msra.mxu0 0.0
    %266 = vmatprep.subr.mxu0 0.0
    %267 = vmatpush1.xpose.msra.mxu0 %v234
    %268 = vmatprep.subr.mxu0 0.0
    %269 = vmatpush2.xpose.msra.mxu0 0.0
    %270 = vmatprep.subr.mxu0 0.0
    %271 = vmatpush2.xpose.msra.mxu0 0.0
    %272 = vmatprep.subr.mxu0 0.0
    %273 = vmatpush2.xpose.msra.mxu0 0.0
    %274 = vmatprep.subr.mxu0 0.0
    %275 = vmatpush2.xpose.msra.mxu0 0.0
    %276 = vmatprep.subr.mxu0 0.0
    %277 = vmatpush2.xpose.msra.mxu0 0.0
    %278 = vmatprep.subr.mxu0 0.0
    %279 = vmatpush2.xpose.msra.mxu0 0.0
    %280 = vmatprep.subr.mxu0 0.0
    %281 = vmatpush2.xpose.msra.mxu0 0.0
    %282 = vmatprep.subr.mxu0 0.0
    %283 = vmatpush2.xpose.msra.mxu0 0.0
    %284 = vmatprep.subr.mxu0 0.0
    %285 = vmatpush2.xpose.msra.mxu0 0.0
    %286 = vmatprep.subr.mxu0 0.0
    %287 = vmatpush2.xpose.msra.mxu0 0.0
    %288 = vmatprep.subr.mxu0 0.0
    %289 = vmatpush2.xpose.msra.mxu0 0.0
    %290 = vmatprep.subr.mxu0 0.0
    %291 = vmatpush2.xpose.msra.mxu0 0.0
    %292 = vmatprep.subr.mxu0 0.0
    %293 = vmatpush2.xpose.msra.mxu0 0.0
    %294 = vmatprep.subr.mxu0 0.0
    %295 = vmatpush2.xpose.msra.mxu0 0.0
    %296 = vmatprep.subr.mxu0 0.0
    %297 = vmatpush2.xpose.msra.mxu0 0.0
    %298 = vmatprep.subr.mxu0 0.0
    %299 = vmatpush2.xpose.msra.mxu0 0.0
    %300 = vmatprep.mubr.f32.mxu0 0.0
    %301 = vmatmul.mubr.f32.gmra.mxu0 %v231
    %v302 = vpop.f32.mrf.mxu0
    %v303 = vadd.f32 0.0, %v302
    %v304 = vpop.f32.mrf.mxu0
    %305 = vdwg.mxu0
    %306 = vxpose.xlu0.b32.start [1/16] %v63, 128
    %307 = vxpose.xlu0.b32.cont [2/16] 0.0, 128
    %308 = vxpose.xlu0.b32.cont [3/16] 0.0, 128
    %309 = vxpose.xlu0.b32.cont [4/16] 0.0, 128
    %310 = vxpose.xlu0.b32.cont [5/16] 0.0, 128
    %311 = vxpose.xlu0.b32.cont [6/16] 0.0, 128
    %312 = vxpose.xlu0.b32.cont [7/16] 0.0, 128
    %313 = vxpose.xlu0.b32.cont [8/16] 0.0, 128
    %314 = vxpose.xlu0.b32.cont [9/16] 0.0, 128
    %315 = vxpose.xlu0.b32.cont [10/16] 0.0, 128
    %316 = vxpose.xlu0.b32.cont [11/16] 0.0, 128
    %317 = vxpose.xlu0.b32.cont [12/16] 0.0, 128
    %318 = vxpose.xlu0.b32.cont [13/16] 0.0, 128
    %319 = vxpose.xlu0.b32.cont [14/16] 0.0, 128
    %320 = vxpose.xlu0.b32.cont [15/16] 0.0, 128
    %321 = vxpose.xlu0.b32.end [16/16] 0.0, 128
    %v322 = vpop.trf.xlu0
    %v323 = vpop.trf.xlu0
    %v324 = vpop.trf.xlu0
    %v325 = vpop.trf.xlu0
    %v326 = vpop.trf.xlu0
    %v327 = vpop.trf.xlu0
    %v328 = vpop.trf.xlu0
    %v329 = vpop.trf.xlu0
    %v330 = vpop.trf.xlu0
    %v331 = vpop.trf.xlu0
    %v332 = vpop.trf.xlu0
    %v333 = vpop.trf.xlu0
    %v334 = vpop.trf.xlu0
    %v335 = vpop.trf.xlu0
    %v336 = vpop.trf.xlu0
    %v337 = vpop.trf.xlu0
    %vm338 = vcmask 23552
    %v340 = vsel %vm338, %v322, 0
    %v343 = vsel %vm338, %v303, 0
    %345 = vmatprep.subr.mxu0 0.0
    %346 = vmatpush1.xpose.msra.mxu0 0.0
    %347 = vmatprep.subr.mxu0 0.0
    %348 = vmatpush1.xpose.msra.mxu0 0.0
    %349 = vmatprep.subr.mxu0 0.0
    %350 = vmatpush1.xpose.msra.mxu0 0.0
    %351 = vmatprep.subr.mxu0 0.0
    %352 = vmatpush1.xpose.msra.mxu0 0.0
    %353 = vmatprep.subr.mxu0 0.0
    %354 = vmatpush1.xpose.msra.mxu0 0.0
    %355 = vmatprep.subr.mxu0 0.0
    %356 = vmatpush1.xpose.msra.mxu0 0.0
    %357 = vmatprep.subr.mxu0 0.0
    %358 = vmatpush1.xpose.msra.mxu0 0.0
    %359 = vmatprep.subr.mxu0 0.0
    %360 = vmatpush1.xpose.msra.mxu0 0.0
    %361 = vmatprep.subr.mxu0 0.0
    %362 = vmatpush1.xpose.msra.mxu0 0.0
    %363 = vmatprep.subr.mxu0 0.0
    %364 = vmatpush1.xpose.msra.mxu0 0.0
    %365 = vmatprep.subr.mxu0 0.0
    %366 = vmatpush1.xpose.msra.mxu0 0.0
    %367 = vmatprep.subr.mxu0 0.0
    %368 = vmatpush1.xpose.msra.mxu0 0.0
    %369 = vmatprep.subr.mxu0 0.0
    %370 = vmatpush1.xpose.msra.mxu0 0.0
    %371 = vmatprep.subr.mxu0 0.0
    %372 = vmatpush1.xpose.msra.mxu0 0.0
    %373 = vmatprep.subr.mxu0 0.0
    %374 = vmatpush1.xpose.msra.mxu0 0.0
    %375 = vmatprep.subr.mxu0 0.0
    %376 = vmatpush1.xpose.msra.mxu0 %v343
    %377 = vmatprep.subr.mxu0 0.0
    %378 = vmatpush2.xpose.msra.mxu0 0.0
    %379 = vmatprep.subr.mxu0 0.0
    %380 = vmatpush2.xpose.msra.mxu0 0.0
    %381 = vmatprep.subr.mxu0 0.0
    %382 = vmatpush2.xpose.msra.mxu0 0.0
    %383 = vmatprep.subr.mxu0 0.0
    %384 = vmatpush2.xpose.msra.mxu0 0.0
    %385 = vmatprep.subr.mxu0 0.0
    %386 = vmatpush2.xpose.msra.mxu0 0.0
    %387 = vmatprep.subr.mxu0 0.0
    %388 = vmatpush2.xpose.msra.mxu0 0.0
    %389 = vmatprep.subr.mxu0 0.0
    %390 = vmatpush2.xpose.msra.mxu0 0.0
    %391 = vmatprep.subr.mxu0 0.0
    %392 = vmatpush2.xpose.msra.mxu0 0.0
    %393 = vmatprep.subr.mxu0 0.0
    %394 = vmatpush2.xpose.msra.mxu0 0.0
    %395 = vmatprep.subr.mxu0 0.0
    %396 = vmatpush2.xpose.msra.mxu0 0.0
    %397 = vmatprep.subr.mxu0 0.0
    %398 = vmatpush2.xpose.msra.mxu0 0.0
    %399 = vmatprep.subr.mxu0 0.0
    %400 = vmatpush2.xpose.msra.mxu0 0.0
    %401 = vmatprep.subr.mxu0 0.0
    %402 = vmatpush2.xpose.msra.mxu0 0.0
    %403 = vmatprep.subr.mxu0 0.0
    %404 = vmatpush2.xpose.msra.mxu0 0.0
    %405 = vmatprep.subr.mxu0 0.0
    %406 = vmatpush2.xpose.msra.mxu0 0.0
    %407 = vmatprep.subr.mxu0 0.0
    %408 = vmatpush2.xpose.msra.mxu0 0.0
    %409 = vmatprep.mubr.f32.mxu0 0.0
    %410 = vmatmul.mubr.f32.gmra.mxu0 %v340
    %v411 = vpop.f32.mrf.mxu0
    %v412 = vadd.f32 0.0, %v411
    %v413 = vpop.f32.mrf.mxu0
    %414 = vdwg.mxu0
    %v415 = vlaneseq
    %v416 = vshrl.u32 %v415, 7
    %v417 = vsub.s32 0, %v416
    %v418 = vrot.slane %v412, %v417
    %420 = vbcast.lane.b32.xlu0 %v418, 256
    %v421 = vpop.permute.xlu0 %420
    %v422 = vlaneseq
    %v423 = vshrl.u32 %v422, 7
    %v424 = vsub.s32 1, %v423
    %v425 = vrot.slane %v412, %v424
    %427 = vbcast.lane.b32.xlu0 %v425, 256
    %v428 = vpop.permute.xlu0 %427
    %v429 = vlaneseq
    %v430 = vshrl.u32 %v429, 7
    %v431 = vsub.s32 2, %v430
    %v432 = vrot.slane %v412, %v431
    %434 = vbcast.lane.b32.xlu0 %v432, 256
    %v435 = vpop.permute.xlu0 %434
    %v436 = vlaneseq
    %v437 = vshrl.u32 %v436, 7
    %v438 = vsub.s32 3, %v437
    %v439 = vrot.slane %v412, %v438
    %441 = vbcast.lane.b32.xlu0 %v439, 256
    %v442 = vpop.permute.xlu0 %441
    %v443 = vlaneseq
    %v444 = vshrl.u32 %v443, 7
    %v445 = vsub.s32 4, %v444
    %v446 = vrot.slane %v412, %v445
    %448 = vbcast.lane.b32.xlu0 %v446, 256
    %v449 = vpop.permute.xlu0 %448
    %v450 = vlaneseq
    %v451 = vshrl.u32 %v450, 7
    %v452 = vsub.s32 5, %v451
    %v453 = vrot.slane %v412, %v452
    %455 = vbcast.lane.b32.xlu0 %v453, 256
    %v456 = vpop.permute.xlu0 %455
    %v457 = vlaneseq
    %v458 = vshrl.u32 %v457, 7
    %v459 = vsub.s32 6, %v458
    %v460 = vrot.slane %v412, %v459
    %462 = vbcast.lane.b32.xlu0 %v460, 256
    %v463 = vpop.permute.xlu0 %462
    %v464 = vlaneseq
    %v465 = vshrl.u32 %v464, 7
    %v466 = vsub.s32 7, %v465
    %v467 = vrot.slane %v412, %v466
    %469 = vbcast.lane.b32.xlu0 %v467, 256
    %v470 = vpop.permute.xlu0 %469
    %v480 = vunpack.c.l.s4 839922192
    %v481 = vunpack.c.0.s8 %v480
    %v482 = vlaneseq
    %v483 = vshrl.u32 %v482, 7
    %v484 = vsub.s32 %v481, %v483
    %v485 = vrot.slane %v421, %v484
    %v487 = vunpack.c.l.s4 839922192
    %v488 = vunpack.c.0.s8 %v487
    %v489 = vlaneseq
    %v490 = vshrl.u32 %v489, 7
    %v491 = vsub.s32 %v488, %v490
    %v492 = vrot.slane %v428, %v491
    %v494 = vunpack.c.l.s4 839922192
    %v495 = vunpack.c.0.s8 %v494
    %v496 = vlaneseq
    %v497 = vshrl.u32 %v496, 7
    %v498 = vsub.s32 %v495, %v497
    %v499 = vrot.slane %v435, %v498
    %v501 = vunpack.c.l.s4 839922192
    %v502 = vunpack.c.0.s8 %v501
    %v503 = vlaneseq
    %v504 = vshrl.u32 %v503, 7
    %v505 = vsub.s32 %v502, %v504
    %v506 = vrot.slane %v442, %v505
    %v508 = vunpack.c.l.s4 839922192
    %v509 = vunpack.c.0.s8 %v508
    %v510 = vlaneseq
    %v511 = vshrl.u32 %v510, 7
    %v512 = vsub.s32 %v509, %v511
    %v513 = vrot.slane %v449, %v512
    %v515 = vunpack.c.l.s4 839922192
    %v516 = vunpack.c.0.s8 %v515
    %v517 = vlaneseq
    %v518 = vshrl.u32 %v517, 7
    %v519 = vsub.s32 %v516, %v518
    %v520 = vrot.slane %v456, %v519
    %v522 = vunpack.c.l.s4 839922192
    %v523 = vunpack.c.0.s8 %v522
    %v524 = vlaneseq
    %v525 = vshrl.u32 %v524, 7
    %v526 = vsub.s32 %v523, %v525
    %v527 = vrot.slane %v463, %v526
    %v529 = vunpack.c.l.s4 839922192
    %v530 = vunpack.c.0.s8 %v529
    %v531 = vlaneseq
    %v532 = vshrl.u32 %v531, 7
    %v533 = vsub.s32 %v530, %v532
    %v534 = vrot.slane %v470, %v533
    %v543 = vsub.f32 %v55, %v485
    %v544 = vsub.f32 %v56, %v492
    %v545 = vsub.f32 %v57, %v499
    %v546 = vsub.f32 %v58, %v506
    %v547 = vsub.f32 %v59, %v513
    %v548 = vsub.f32 %v60, %v520
    %v549 = vsub.f32 %v61, %v527
    %v550 = vsub.f32 %v62, %v534
    %v551 = vmul.f32 %v543, %v543
    %v552 = vmul.f32 %v544, %v544
    %v553 = vmul.f32 %v545, %v545
    %v554 = vmul.f32 %v546, %v546
    %v555 = vmul.f32 %v547, %v547
    %v556 = vmul.f32 %v548, %v548
    %v557 = vmul.f32 %v549, %v549
    %v558 = vmul.f32 %v550, %v550
    %v567 = vcombine.high %v551, %v551
    %v568 = vcombine.high %v552, %v552
    %v569 = vcombine.high %v553, %v553
    %v570 = vcombine.high %v554, %v554
    %v571 = vcombine.high %v555, %v555
    %v572 = vcombine.high %v556, %v556
    %v573 = vcombine.high %v557, %v557
    %v574 = vcombine.high %v558, %v558
    %v583 = vsel %vm90, %v551, 0.0
    %v584 = vsel %vm90, %v567, 0.0
    %v585 = vadd.f32 %v583, %v584
    %586 = vadd.xlane.f32.xlu0 %v585
    %v587 = vpop.xlane.xlu0 %586
    %v588 = vsel %vm90, %v552, 0.0
    %v589 = vsel %vm90, %v568, 0.0
    %v590 = vadd.f32 %v588, %v589
    %591 = vadd.xlane.f32.xlu0 %v590
    %v592 = vpop.xlane.xlu0 %591
    %v593 = vsel %vm90, %v553, 0.0
    %v594 = vsel %vm90, %v569, 0.0
    %v595 = vadd.f32 %v593, %v594
    %596 = vadd.xlane.f32.xlu0 %v595
    %v597 = vpop.xlane.xlu0 %596
    %v598 = vsel %vm90, %v554, 0.0
    %v599 = vsel %vm90, %v570, 0.0
    %v600 = vadd.f32 %v598, %v599
    %601 = vadd.xlane.f32.xlu0 %v600
    %v602 = vpop.xlane.xlu0 %601
    %v603 = vsel %vm90, %v555, 0.0
    %v604 = vsel %vm90, %v571, 0.0
    %v605 = vadd.f32 %v603, %v604
    %606 = vadd.xlane.f32.xlu0 %v605
    %v607 = vpop.xlane.xlu0 %606
    %v608 = vsel %vm90, %v556, 0.0
    %v609 = vsel %vm90, %v572, 0.0
    %v610 = vadd.f32 %v608, %v609
    %611 = vadd.xlane.f32.xlu0 %v610
    %v612 = vpop.xlane.xlu0 %611
    %v613 = vsel %vm90, %v557, 0.0
    %v614 = vsel %vm90, %v573, 0.0
    %v615 = vadd.f32 %v613, %v614
    %616 = vadd.xlane.f32.xlu0 %v615
    %v617 = vpop.xlane.xlu0 %616
    %v618 = vsel %vm90, %v558, 0.0
    %v619 = vsel %vm90, %v574, 0.0
    %v620 = vadd.f32 %v618, %v619
    %621 = vadd.xlane.f32.xlu0 %v620
    %v622 = vpop.xlane.xlu0 %621
    %v631 = vlaneseq
    %v632 = vshrl.u32 %v631, 7
    %v633 = vsub.s32 %v149, %v632
    %v634 = vrot.slane %v587, %v633
    %v635 = vlaneseq
    %v636 = vshrl.u32 %v635, 7
    %v637 = vsub.s32 %v149, %v636
    %v638 = vrot.slane %v592, %v637
    %v639 = vlaneseq
    %v640 = vshrl.u32 %v639, 7
    %v641 = vsub.s32 %v149, %v640
    %v642 = vrot.slane %v597, %v641
    %v643 = vlaneseq
    %v644 = vshrl.u32 %v643, 7
    %v645 = vsub.s32 %v149, %v644
    %v646 = vrot.slane %v602, %v645
    %v647 = vlaneseq
    %v648 = vshrl.u32 %v647, 7
    %v649 = vsub.s32 %v149, %v648
    %v650 = vrot.slane %v607, %v649
    %v651 = vlaneseq
    %v652 = vshrl.u32 %v651, 7
    %v653 = vsub.s32 %v149, %v652
    %v654 = vrot.slane %v612, %v653
    %v655 = vlaneseq
    %v656 = vshrl.u32 %v655, 7
    %v657 = vsub.s32 %v149, %v656
    %v658 = vrot.slane %v617, %v657
    %v659 = vlaneseq
    %v660 = vshrl.u32 %v659, 7
    %v661 = vsub.s32 %v149, %v660
    %v662 = vrot.slane %v622, %v661
    %v663 = vsel %vm182, %v638, %v634
    %v664 = vsel %vm184, %v642, %v663
    %v665 = vsel %vm186, %v646, %v664
    %v666 = vsel %vm188, %v650, %v665
    %v667 = vsel %vm190, %v654, %v666
    %v668 = vsel %vm192, %v658, %v667
    %v669 = vsel %vm194, %v662, %v668
    %671 = vxpose.xlu0.b32.start [1/16] %v669, 128
    %672 = vxpose.xlu0.b32.cont [2/16] 0.0, 128
    %673 = vxpose.xlu0.b32.cont [3/16] 0.0, 128
    %674 = vxpose.xlu0.b32.cont [4/16] 0.0, 128
    %675 = vxpose.xlu0.b32.cont [5/16] 0.0, 128
    %676 = vxpose.xlu0.b32.cont [6/16] 0.0, 128
    %677 = vxpose.xlu0.b32.cont [7/16] 0.0, 128
    %678 = vxpose.xlu0.b32.cont [8/16] 0.0, 128
    %679 = vxpose.xlu0.b32.cont [9/16] 0.0, 128
    %680 = vxpose.xlu0.b32.cont [10/16] 0.0, 128
    %681 = vxpose.xlu0.b32.cont [11/16] 0.0, 128
    %682 = vxpose.xlu0.b32.cont [12/16] 0.0, 128
    %683 = vxpose.xlu0.b32.cont [13/16] 0.0, 128
    %684 = vxpose.xlu0.b32.cont [14/16] 0.0, 128
    %685 = vxpose.xlu0.b32.cont [15/16] 0.0, 128
    %686 = vxpose.xlu0.b32.end [16/16] 0.0, 128
    %v687 = vpop.trf.xlu0
    %v688 = vpop.trf.xlu0
    %v689 = vpop.trf.xlu0
    %v690 = vpop.trf.xlu0
    %v691 = vpop.trf.xlu0
    %v692 = vpop.trf.xlu0
    %v693 = vpop.trf.xlu0
    %v694 = vpop.trf.xlu0
    %v695 = vpop.trf.xlu0
    %v696 = vpop.trf.xlu0
    %v697 = vpop.trf.xlu0
    %v698 = vpop.trf.xlu0
    %v699 = vpop.trf.xlu0
    %v700 = vpop.trf.xlu0
    %v701 = vpop.trf.xlu0
    %v702 = vpop.trf.xlu0
    %v704 = vsel %vm229, %v687, 0
    %706 = vmatprep.subr.mxu0 0.0
    %707 = vmatpush1.xpose.msra.mxu0 0.0
    %708 = vmatprep.subr.mxu0 0.0
    %709 = vmatpush1.xpose.msra.mxu0 0.0
    %710 = vmatprep.subr.mxu0 0.0
    %711 = vmatpush1.xpose.msra.mxu0 0.0
    %712 = vmatprep.subr.mxu0 0.0
    %713 = vmatpush1.xpose.msra.mxu0 0.0
    %714 = vmatprep.subr.mxu0 0.0
    %715 = vmatpush1.xpose.msra.mxu0 0.0
    %716 = vmatprep.subr.mxu0 0.0
    %717 = vmatpush1.xpose.msra.mxu0 0.0
    %718 = vmatprep.subr.mxu0 0.0
    %719 = vmatpush1.xpose.msra.mxu0 0.0
    %720 = vmatprep.subr.mxu0 0.0
    %721 = vmatpush1.xpose.msra.mxu0 0.0
    %722 = vmatprep.subr.mxu0 0.0
    %723 = vmatpush1.xpose.msra.mxu0 0.0
    %724 = vmatprep.subr.mxu0 0.0
    %725 = vmatpush1.xpose.msra.mxu0 0.0
    %726 = vmatprep.subr.mxu0 0.0
    %727 = vmatpush1.xpose.msra.mxu0 0.0
    %728 = vmatprep.subr.mxu0 0.0
    %729 = vmatpush1.xpose.msra.mxu0 0.0
    %730 = vmatprep.subr.mxu0 0.0
    %731 = vmatpush1.xpose.msra.mxu0 0.0
    %732 = vmatprep.subr.mxu0 0.0
    %733 = vmatpush1.xpose.msra.mxu0 0.0
    %734 = vmatprep.subr.mxu0 0.0
    %735 = vmatpush1.xpose.msra.mxu0 0.0
    %736 = vmatprep.subr.mxu0 0.0
    %737 = vmatpush1.xpose.msra.mxu0 %v234
    %738 = vmatprep.subr.mxu0 0.0
    %739 = vmatpush2.xpose.msra.mxu0 0.0
    %740 = vmatprep.subr.mxu0 0.0
    %741 = vmatpush2.xpose.msra.mxu0 0.0
    %742 = vmatprep.subr.mxu0 0.0
    %743 = vmatpush2.xpose.msra.mxu0 0.0
    %744 = vmatprep.subr.mxu0 0.0
    %745 = vmatpush2.xpose.msra.mxu0 0.0
    %746 = vmatprep.subr.mxu0 0.0
    %747 = vmatpush2.xpose.msra.mxu0 0.0
    %748 = vmatprep.subr.mxu0 0.0
    %749 = vmatpush2.xpose.msra.mxu0 0.0
    %750 = vmatprep.subr.mxu0 0.0
    %751 = vmatpush2.xpose.msra.mxu0 0.0
    %752 = vmatprep.subr.mxu0 0.0
    %753 = vmatpush2.xpose.msra.mxu0 0.0
    %754 = vmatprep.subr.mxu0 0.0
    %755 = vmatpush2.xpose.msra.mxu0 0.0
    %756 = vmatprep.subr.mxu0 0.0
    %757 = vmatpush2.xpose.msra.mxu0 0.0
    %758 = vmatprep.subr.mxu0 0.0
    %759 = vmatpush2.xpose.msra.mxu0 0.0
    %760 = vmatprep.subr.mxu0 0.0
    %761 = vmatpush2.xpose.msra.mxu0 0.0
    %762 = vmatprep.subr.mxu0 0.0
    %763 = vmatpush2.xpose.msra.mxu0 0.0
    %764 = vmatprep.subr.mxu0 0.0
    %765 = vmatpush2.xpose.msra.mxu0 0.0
    %766 = vmatprep.subr.mxu0 0.0
    %767 = vmatpush2.xpose.msra.mxu0 0.0
    %768 = vmatprep.subr.mxu0 0.0
    %769 = vmatpush2.xpose.msra.mxu0 0.0
    %770 = vmatprep.mubr.f32.mxu0 0.0
    %771 = vmatmul.mubr.f32.gmra.mxu0 %v704
    %v772 = vpop.f32.mrf.mxu0
    %v773 = vadd.f32 1e-05, %v772
    %v774 = vpop.f32.mrf.mxu0
    %775 = vdwg.mxu0
    %v776 = vrsqrt.pop %v773
    %v777 = vmul.f32 %v776, %v64
    %v778 = vmul.f32 %v303, %v777
    %v779 = vsub.f32 %v65, %v778
    %v781 = vsel %vm338, %v777, 0
    %783 = vmatprep.subr.mxu0 0.0
    %784 = vmatpush1.xpose.msra.mxu0 0.0
    %785 = vmatprep.subr.mxu0 0.0
    %786 = vmatpush1.xpose.msra.mxu0 0.0
    %787 = vmatprep.subr.mxu0 0.0
    %788 = vmatpush1.xpose.msra.mxu0 0.0
    %789 = vmatprep.subr.mxu0 0.0
    %790 = vmatpush1.xpose.msra.mxu0 0.0
    %791 = vmatprep.subr.mxu0 0.0
    %792 = vmatpush1.xpose.msra.mxu0 0.0
    %793 = vmatprep.subr.mxu0 0.0
    %794 = vmatpush1.xpose.msra.mxu0 0.0
    %795 = vmatprep.subr.mxu0 0.0
    %796 = vmatpush1.xpose.msra.mxu0 0.0
    %797 = vmatprep.subr.mxu0 0.0
    %798 = vmatpush1.xpose.msra.mxu0 0.0
    %799 = vmatprep.subr.mxu0 0.0
    %800 = vmatpush1.xpose.msra.mxu0 0.0
    %801 = vmatprep.subr.mxu0 0.0
    %802 = vmatpush1.xpose.msra.mxu0 0.0
    %803 = vmatprep.subr.mxu0 0.0
    %804 = vmatpush1.xpose.msra.mxu0 0.0
    %805 = vmatprep.subr.mxu0 0.0
    %806 = vmatpush1.xpose.msra.mxu0 0.0
    %807 = vmatprep.subr.mxu0 0.0
    %808 = vmatpush1.xpose.msra.mxu0 0.0
    %809 = vmatprep.subr.mxu0 0.0
    %810 = vmatpush1.xpose.msra.mxu0 0.0
    %811 = vmatprep.subr.mxu0 0.0
    %812 = vmatpush1.xpose.msra.mxu0 0.0
    %813 = vmatprep.subr.mxu0 0.0
    %814 = vmatpush1.xpose.msra.mxu0 %v781
    %815 = vmatprep.subr.mxu0 0.0
    %816 = vmatpush2.xpose.msra.mxu0 0.0
    %817 = vmatprep.subr.mxu0 0.0
    %818 = vmatpush2.xpose.msra.mxu0 0.0
    %819 = vmatprep.subr.mxu0 0.0
    %820 = vmatpush2.xpose.msra.mxu0 0.0
    %821 = vmatprep.subr.mxu0 0.0
    %822 = vmatpush2.xpose.msra.mxu0 0.0
    %823 = vmatprep.subr.mxu0 0.0
    %824 = vmatpush2.xpose.msra.mxu0 0.0
    %825 = vmatprep.subr.mxu0 0.0
    %826 = vmatpush2.xpose.msra.mxu0 0.0
    %827 = vmatprep.subr.mxu0 0.0
    %828 = vmatpush2.xpose.msra.mxu0 0.0
    %829 = vmatprep.subr.mxu0 0.0
    %830 = vmatpush2.xpose.msra.mxu0 0.0
    %831 = vmatprep.subr.mxu0 0.0
    %832 = vmatpush2.xpose.msra.mxu0 0.0
    %833 = vmatprep.subr.mxu0 0.0
    %834 = vmatpush2.xpose.msra.mxu0 0.0
    %835 = vmatprep.subr.mxu0 0.0
    %836 = vmatpush2.xpose.msra.mxu0 0.0
    %837 = vmatprep.subr.mxu0 0.0
    %838 = vmatpush2.xpose.msra.mxu0 0.0
    %839 = vmatprep.subr.mxu0 0.0
    %840 = vmatpush2.xpose.msra.mxu0 0.0
    %841 = vmatprep.subr.mxu0 0.0
    %842 = vmatpush2.xpose.msra.mxu0 0.0
    %843 = vmatprep.subr.mxu0 0.0
    %844 = vmatpush2.xpose.msra.mxu0 0.0
    %845 = vmatprep.subr.mxu0 0.0
    %846 = vmatpush2.xpose.msra.mxu0 0.0
    %847 = vmatprep.mubr.f32.mxu0 0.0
    %848 = vmatmul.mubr.f32.gmra.mxu0 %v340
    %v849 = vpop.f32.mrf.mxu0
    %v850 = vadd.f32 0.0, %v849
    %v851 = vpop.f32.mrf.mxu0
    %852 = vdwg.mxu0
    %v854 = vsel %vm338, %v779, 0
    %856 = vmatprep.subr.mxu0 0.0
    %857 = vmatpush1.xpose.msra.mxu0 0.0
    %858 = vmatprep.subr.mxu0 0.0
    %859 = vmatpush1.xpose.msra.mxu0 0.0
    %860 = vmatprep.subr.mxu0 0.0
    %861 = vmatpush1.xpose.msra.mxu0 0.0
    %862 = vmatprep.subr.mxu0 0.0
    %863 = vmatpush1.xpose.msra.mxu0 0.0
    %864 = vmatprep.subr.mxu0 0.0
    %865 = vmatpush1.xpose.msra.mxu0 0.0
    %866 = vmatprep.subr.mxu0 0.0
    %867 = vmatpush1.xpose.msra.mxu0 0.0
    %868 = vmatprep.subr.mxu0 0.0
    %869 = vmatpush1.xpose.msra.mxu0 0.0
    %870 = vmatprep.subr.mxu0 0.0
    %871 = vmatpush1.xpose.msra.mxu0 0.0
    %872 = vmatprep.subr.mxu0 0.0
    %873 = vmatpush1.xpose.msra.mxu0 0.0
    %874 = vmatprep.subr.mxu0 0.0
    %875 = vmatpush1.xpose.msra.mxu0 0.0
    %876 = vmatprep.subr.mxu0 0.0
    %877 = vmatpush1.xpose.msra.mxu0 0.0
    %878 = vmatprep.subr.mxu0 0.0
    %879 = vmatpush1.xpose.msra.mxu0 0.0
    %880 = vmatprep.subr.mxu0 0.0
    %881 = vmatpush1.xpose.msra.mxu0 0.0
    %882 = vmatprep.subr.mxu0 0.0
    %883 = vmatpush1.xpose.msra.mxu0 0.0
    %884 = vmatprep.subr.mxu0 0.0
    %885 = vmatpush1.xpose.msra.mxu0 0.0
    %886 = vmatprep.subr.mxu0 0.0
    %887 = vmatpush1.xpose.msra.mxu0 %v854
    %888 = vmatprep.subr.mxu0 0.0
    %889 = vmatpush2.xpose.msra.mxu0 0.0
    %890 = vmatprep.subr.mxu0 0.0
    %891 = vmatpush2.xpose.msra.mxu0 0.0
    %892 = vmatprep.subr.mxu0 0.0
    %893 = vmatpush2.xpose.msra.mxu0 0.0
    %894 = vmatprep.subr.mxu0 0.0
    %895 = vmatpush2.xpose.msra.mxu0 0.0
    %896 = vmatprep.subr.mxu0 0.0
    %897 = vmatpush2.xpose.msra.mxu0 0.0
    %898 = vmatprep.subr.mxu0 0.0
    %899 = vmatpush2.xpose.msra.mxu0 0.0
    %900 = vmatprep.subr.mxu0 0.0
    %901 = vmatpush2.xpose.msra.mxu0 0.0
    %902 = vmatprep.subr.mxu0 0.0
    %903 = vmatpush2.xpose.msra.mxu0 0.0
    %904 = vmatprep.subr.mxu0 0.0
    %905 = vmatpush2.xpose.msra.mxu0 0.0
    %906 = vmatprep.subr.mxu0 0.0
    %907 = vmatpush2.xpose.msra.mxu0 0.0
    %908 = vmatprep.subr.mxu0 0.0
    %909 = vmatpush2.xpose.msra.mxu0 0.0
    %910 = vmatprep.subr.mxu0 0.0
    %911 = vmatpush2.xpose.msra.mxu0 0.0
    %912 = vmatprep.subr.mxu0 0.0
    %913 = vmatpush2.xpose.msra.mxu0 0.0
    %914 = vmatprep.subr.mxu0 0.0
    %915 = vmatpush2.xpose.msra.mxu0 0.0
    %916 = vmatprep.subr.mxu0 0.0
    %917 = vmatpush2.xpose.msra.mxu0 0.0
    %918 = vmatprep.subr.mxu0 0.0
    %919 = vmatpush2.xpose.msra.mxu0 0.0
    %920 = vmatprep.mubr.f32.mxu0 0.0
    %921 = vmatmul.mubr.f32.gmra.mxu0 %v340
    %v922 = vpop.f32.mrf.mxu0
    %v923 = vadd.f32 0.0, %v922
    %v924 = vpop.f32.mrf.mxu0
    %925 = vdwg.mxu0
    %v926 = vlaneseq
    %v927 = vshrl.u32 %v926, 7
    %v928 = vsub.s32 0, %v927
    %v929 = vrot.slane %v850, %v928
    %931 = vbcast.lane.b32.xlu0 %v929, 256
    %v932 = vpop.permute.xlu0 %931
    %v933 = vlaneseq
    %v934 = vshrl.u32 %v933, 7
    %v935 = vsub.s32 1, %v934
    %v936 = vrot.slane %v850, %v935
    %938 = vbcast.lane.b32.xlu0 %v936, 256
    %v939 = vpop.permute.xlu0 %938
    %v940 = vlaneseq
    %v941 = vshrl.u32 %v940, 7
    %v942 = vsub.s32 2, %v941
    %v943 = vrot.slane %v850, %v942
    %945 = vbcast.lane.b32.xlu0 %v943, 256
    %v946 = vpop.permute.xlu0 %945
    %v947 = vlaneseq
    %v948 = vshrl.u32 %v947, 7
    %v949 = vsub.s32 3, %v948
    %v950 = vrot.slane %v850, %v949
    %952 = vbcast.lane.b32.xlu0 %v950, 256
    %v953 = vpop.permute.xlu0 %952
    %v954 = vlaneseq
    %v955 = vshrl.u32 %v954, 7
    %v956 = vsub.s32 4, %v955
    %v957 = vrot.slane %v850, %v956
    %959 = vbcast.lane.b32.xlu0 %v957, 256
    %v960 = vpop.permute.xlu0 %959
    %v961 = vlaneseq
    %v962 = vshrl.u32 %v961, 7
    %v963 = vsub.s32 5, %v962
    %v964 = vrot.slane %v850, %v963
    %966 = vbcast.lane.b32.xlu0 %v964, 256
    %v967 = vpop.permute.xlu0 %966
    %v968 = vlaneseq
    %v969 = vshrl.u32 %v968, 7
    %v970 = vsub.s32 6, %v969
    %v971 = vrot.slane %v850, %v970
    %973 = vbcast.lane.b32.xlu0 %v971, 256
    %v974 = vpop.permute.xlu0 %973
    %v975 = vlaneseq
    %v976 = vshrl.u32 %v975, 7
    %v977 = vsub.s32 7, %v976
    %v978 = vrot.slane %v850, %v977
    %980 = vbcast.lane.b32.xlu0 %v978, 256
    %v981 = vpop.permute.xlu0 %980
    %v991 = vunpack.c.l.s4 839922192
    %v992 = vunpack.c.0.s8 %v991
    %v993 = vlaneseq
    %v994 = vshrl.u32 %v993, 7
    %v995 = vsub.s32 %v992, %v994
    %v996 = vrot.slane %v932, %v995
    %v998 = vunpack.c.l.s4 839922192
    %v999 = vunpack.c.0.s8 %v998
    %v1000 = vlaneseq
    %v1001 = vshrl.u32 %v1000, 7
    %v1002 = vsub.s32 %v999, %v1001
    %v1003 = vrot.slane %v939, %v1002
    %v1005 = vunpack.c.l.s4 839922192
    %v1006 = vunpack.c.0.s8 %v1005
    %v1007 = vlaneseq
    %v1008 = vshrl.u32 %v1007, 7
    %v1009 = vsub.s32 %v1006, %v1008
    %v1010 = vrot.slane %v946, %v1009
    %v1012 = vunpack.c.l.s4 839922192
    %v1013 = vunpack.c.0.s8 %v1012
    %v1014 = vlaneseq
    %v1015 = vshrl.u32 %v1014, 7
    %v1016 = vsub.s32 %v1013, %v1015
    %v1017 = vrot.slane %v953, %v1016
    %v1019 = vunpack.c.l.s4 839922192
    %v1020 = vunpack.c.0.s8 %v1019
    %v1021 = vlaneseq
    %v1022 = vshrl.u32 %v1021, 7
    %v1023 = vsub.s32 %v1020, %v1022
    %v1024 = vrot.slane %v960, %v1023
    %v1026 = vunpack.c.l.s4 839922192
    %v1027 = vunpack.c.0.s8 %v1026
    %v1028 = vlaneseq
    %v1029 = vshrl.u32 %v1028, 7
    %v1030 = vsub.s32 %v1027, %v1029
    %v1031 = vrot.slane %v967, %v1030
    %v1033 = vunpack.c.l.s4 839922192
    %v1034 = vunpack.c.0.s8 %v1033
    %v1035 = vlaneseq
    %v1036 = vshrl.u32 %v1035, 7
    %v1037 = vsub.s32 %v1034, %v1036
    %v1038 = vrot.slane %v974, %v1037
    %v1040 = vunpack.c.l.s4 839922192
    %v1041 = vunpack.c.0.s8 %v1040
    %v1042 = vlaneseq
    %v1043 = vshrl.u32 %v1042, 7
    %v1044 = vsub.s32 %v1041, %v1043
    %v1045 = vrot.slane %v981, %v1044
    %v1054 = vmul.f32 %v55, %v996
    %v1055 = vmul.f32 %v56, %v1003
    %v1056 = vmul.f32 %v57, %v1010
    %v1057 = vmul.f32 %v58, %v1017
    %v1058 = vmul.f32 %v59, %v1024
    %v1059 = vmul.f32 %v60, %v1031
    %v1060 = vmul.f32 %v61, %v1038
    %v1061 = vmul.f32 %v62, %v1045
    %v1062 = vlaneseq
    %v1063 = vshrl.u32 %v1062, 7
    %v1064 = vsub.s32 0, %v1063
    %v1065 = vrot.slane %v923, %v1064
    %1067 = vbcast.lane.b32.xlu0 %v1065, 256
    %v1068 = vpop.permute.xlu0 %1067
    %v1069 = vlaneseq
    %v1070 = vshrl.u32 %v1069, 7
    %v1071 = vsub.s32 1, %v1070
    %v1072 = vrot.slane %v923, %v1071
    %1074 = vbcast.lane.b32.xlu0 %v1072, 256
    %v1075 = vpop.permute.xlu0 %1074
    %v1076 = vlaneseq
    %v1077 = vshrl.u32 %v1076, 7
    %v1078 = vsub.s32 2, %v1077
    %v1079 = vrot.slane %v923, %v1078
    %1081 = vbcast.lane.b32.xlu0 %v1079, 256
    %v1082 = vpop.permute.xlu0 %1081
    %v1083 = vlaneseq
    %v1084 = vshrl.u32 %v1083, 7
    %v1085 = vsub.s32 3, %v1084
    %v1086 = vrot.slane %v923, %v1085
    %1088 = vbcast.lane.b32.xlu0 %v1086, 256
    %v1089 = vpop.permute.xlu0 %1088
    %v1090 = vlaneseq
    %v1091 = vshrl.u32 %v1090, 7
    %v1092 = vsub.s32 4, %v1091
    %v1093 = vrot.slane %v923, %v1092
    %1095 = vbcast.lane.b32.xlu0 %v1093, 256
    %v1096 = vpop.permute.xlu0 %1095
    %v1097 = vlaneseq
    %v1098 = vshrl.u32 %v1097, 7
    %v1099 = vsub.s32 5, %v1098
    %v1100 = vrot.slane %v923, %v1099
    %1102 = vbcast.lane.b32.xlu0 %v1100, 256
    %v1103 = vpop.permute.xlu0 %1102
    %v1104 = vlaneseq
    %v1105 = vshrl.u32 %v1104, 7
    %v1106 = vsub.s32 6, %v1105
    %v1107 = vrot.slane %v923, %v1106
    %1109 = vbcast.lane.b32.xlu0 %v1107, 256
    %v1110 = vpop.permute.xlu0 %1109
    %v1111 = vlaneseq
    %v1112 = vshrl.u32 %v1111, 7
    %v1113 = vsub.s32 7, %v1112
    %v1114 = vrot.slane %v923, %v1113
    %1116 = vbcast.lane.b32.xlu0 %v1114, 256
    %v1117 = vpop.permute.xlu0 %1116
    %v1127 = vunpack.c.l.s4 839922192
    %v1128 = vunpack.c.0.s8 %v1127
    %v1129 = vlaneseq
    %v1130 = vshrl.u32 %v1129, 7
    %v1131 = vsub.s32 %v1128, %v1130
    %v1132 = vrot.slane %v1068, %v1131
    %v1134 = vunpack.c.l.s4 839922192
    %v1135 = vunpack.c.0.s8 %v1134
    %v1136 = vlaneseq
    %v1137 = vshrl.u32 %v1136, 7
    %v1138 = vsub.s32 %v1135, %v1137
    %v1139 = vrot.slane %v1075, %v1138
    %v1141 = vunpack.c.l.s4 839922192
    %v1142 = vunpack.c.0.s8 %v1141
    %v1143 = vlaneseq
    %v1144 = vshrl.u32 %v1143, 7
    %v1145 = vsub.s32 %v1142, %v1144
    %v1146 = vrot.slane %v1082, %v1145
    %v1148 = vunpack.c.l.s4 839922192
    %v1149 = vunpack.c.0.s8 %v1148
    %v1150 = vlaneseq
    %v1151 = vshrl.u32 %v1150, 7
    %v1152 = vsub.s32 %v1149, %v1151
    %v1153 = vrot.slane %v1089, %v1152
    %v1155 = vunpack.c.l.s4 839922192
    %v1156 = vunpack.c.0.s8 %v1155
    %v1157 = vlaneseq
    %v1158 = vshrl.u32 %v1157, 7
    %v1159 = vsub.s32 %v1156, %v1158
    %v1160 = vrot.slane %v1096, %v1159
    %v1162 = vunpack.c.l.s4 839922192
    %v1163 = vunpack.c.0.s8 %v1162
    %v1164 = vlaneseq
    %v1165 = vshrl.u32 %v1164, 7
    %v1166 = vsub.s32 %v1163, %v1165
    %v1167 = vrot.slane %v1103, %v1166
    %v1169 = vunpack.c.l.s4 839922192
    %v1170 = vunpack.c.0.s8 %v1169
    %v1171 = vlaneseq
    %v1172 = vshrl.u32 %v1171, 7
    %v1173 = vsub.s32 %v1170, %v1172
    %v1174 = vrot.slane %v1110, %v1173
    %v1176 = vunpack.c.l.s4 839922192
    %v1177 = vunpack.c.0.s8 %v1176
    %v1178 = vlaneseq
    %v1179 = vshrl.u32 %v1178, 7
    %v1180 = vsub.s32 %v1177, %v1179
    %v1181 = vrot.slane %v1117, %v1180
    %v1190 = vadd.f32 %v1054, %v1132
    %v1191 = vadd.f32 %v1055, %v1139
    %v1192 = vadd.f32 %v1056, %v1146
    %v1193 = vadd.f32 %v1057, %v1153
    %v1194 = vadd.f32 %v1058, %v1160
    %v1195 = vadd.f32 %v1059, %v1167
    %v1196 = vadd.f32 %v1060, %v1174
    %v1197 = vadd.f32 %v1061, %v1181
    %1198 = vst [vmem:[#allocation8] sm:$0xff] %v1190
    %1199 = vst [vmem:[#allocation8 + $0x8] sm:$0xff] %v1191
    %1200 = vst [vmem:[#allocation8 + $0x10] sm:$0xff] %v1192
    %1201 = vst [vmem:[#allocation8 + $0x18] sm:$0xff] %v1193
    %1202 = vst [vmem:[#allocation8 + $0x20] sm:$0xff] %v1194
    %1203 = vst [vmem:[#allocation8 + $0x28] sm:$0xff] %v1195
    %1204 = vst [vmem:[#allocation8 + $0x30] sm:$0xff] %v1196
    %1205 = vst [vmem:[#allocation8 + $0x38] sm:$0xff] %v1197
    // Predicated region
    $region30: #{tpu_custom_call.1} parent=1 // pred_check
      _
    $region31: #{tpu_custom_call.1} parent=1 // pred_check_branch
      %1207 = sbr.rel (0) target = $region33
    $region32: #{tpu_custom_call.1} parent=1 // pred_region
      %s1209 = ssub.s32 1024, 1024
      %1210 = vsyncadd [#allocation4], %s1209
      %s1211 = sshll.u32 [#allocation8], 4
      %s1212 = int_to_ptr.vmem [resolvable:$true] %s1211
      %1217 = dma.vmem_to_hbm [thread:$0]  %s1212, 1024, %s4, [#allocation4], 128, 128, 8
    $region33: #{tpu_custom_call.1} parent=1 // pred_fallthru
      _
    // Predicated region
    $region34: #{tpu_custom_call.1} parent=1 // pred_check
      _
    $region35: #{tpu_custom_call.1} parent=1 // pred_check_branch
      %1219 = sbr.rel (0) target = $region37
    $region36: #{tpu_custom_call.1} parent=1 // pred_region
      %1220 = dma.done [#allocation4], 1024
    $region37: #{tpu_custom_call.1} parent=1 // pred_fallthru
      _
    %1221 = vsyncpa [#allocation3], 1
    %1222 = vsyncpa [#allocation6], 1
    %1223 = vsyncpa [#allocation4], 1

</llo_original>
